<compile_context>
chip_gen: v5e
topology: v5e:2x2
jax: 0.10.0
libtpu: 0.0.40
codegen_flags: <defaults>
</compile_context>

<pallas_src>
import jax
import jax.numpy as jnp
from jax.experimental import pallas as pl
from jax.experimental.pallas import tpu as pltpu


def compute_positional_encoding_vector(embedding_size: int,
                                       num_tokens: int,
                                       positional_encoding_scalar: float,
                                       dtype=jnp.float32) -> jnp.ndarray:
    """Init-time buffer (matches the PyTorch __init__).  Built and cached in the
    *model* dtype so forward() never pays a per-call cast of the (T, E) table."""
    assert embedding_size % 2 == 0, "EMBEDDING_SIZE must be even (positional encoder)"
    v1 = jnp.arange(num_tokens, dtype=jnp.float32)                                   # (T,)
    v2 = jnp.power(
        jnp.float32(positional_encoding_scalar),
        -2.0 * jnp.arange(embedding_size // 2, dtype=jnp.float32) / embedding_size,  # (E/2,)
    )
    prod = jnp.outer(v1, v2)                                                          # (T, E/2)
    sin = jnp.sin(prod)
    cos = jnp.cos(prod)
    # stack(..., dim=2).view(T, E) -> interleaved [sin0, cos0, sin1, cos1, ...]
    pe = jnp.stack([sin, cos], axis=2).reshape(num_tokens, embedding_size)            # (T, E)
    return pe.astype(dtype)


def _add_pe_kernel(x_ref, pe_ref, o_ref):
    # Shapes either match exactly (row-folded layout) or pe broadcasts along the
    # sublane axis ((1, TC) -> (TB, TC)); both are native VPU broadcasts.
    o_ref[...] = x_ref[...] + pe_ref[...]


def _sublane_unit(dtype) -> int:
    """Minimum sublane tile multiple: 8 (f32), 16 (bf16/f16), 32 (int8/fp8)."""
    bits = jnp.dtype(dtype).itemsize * 8
    return max(8, 256 // max(bits, 1))


def _block_budget():
    """(target x-block bytes, vmem_limit_bytes or None), per TPU generation."""
    try:
        vmem_phys = int(pltpu.get_tpu_info().vmem_capacity_bytes)
    except Exception:
        vmem_phys = 128 << 20  # be conservative if the query is unavailable
    if vmem_phys <= (64 << 20):
        # v7x-class: bigger blocks amortize per-step overhead at 3.2 TB/s HBM;
        # 2*x + 2*out @ 6 MiB ~= 24 MiB + pe, so raise the scoped limit to 48 MiB.
        return 6 << 20, 48 << 20
    # v5e/v6e: 2 MiB blocks (~10 MiB total) fit v5e's 16 MiB scoped default.
    return 2 << 20, None


def _pick_div(full: int, unit: int, max_tile: int):
    """Largest divisor of `full` that is a multiple of `unit` and <= max_tile,
    or None if no such divisor exists (caller handles the fallback)."""
    t = min(full, max_tile)
    t = (t // unit) * unit
    while t >= unit:
        if full % t == 0:
            return t
        t -= unit
    return None


def positional_encoder_forward(embedded_token: jnp.ndarray,
                               pe: jnp.ndarray,
                               *,
                               donate_x: bool = False) -> jnp.ndarray:
    """embedded_token: (B, T, E); pe: (T, E). Returns embedded_token + pe."""
    B, T, E = embedded_token.shape
    assert pe.shape == (T, E)
    dtype = embedded_token.dtype
    pe = pe.astype(dtype)  # no-op when pe is cached in the model dtype (recommended)

    item = jnp.dtype(dtype).itemsize
    unit = _sublane_unit(dtype)
    block_bytes, vmem_limit = _block_budget()
    target_elems = max(1, block_bytes // item)
    TE = T * E

    cost = pl.CostEstimate(flops=B * T * E,
                           transcendentals=0,
                           bytes_accessed=(2 * B * T * E + T * E) * item)

    def _call(x2, pe2, grid, x_spec, pe_spec, out_spec):
        cp_kwargs = dict(dimension_semantics=("parallel",) * len(grid))
        if vmem_limit is not None:
            cp_kwargs["vmem_limit_bytes"] = int(vmem_limit)
        extra = {"input_output_aliases": {0: 0}} if donate_x else {}
        return pl.pallas_call(
            _add_pe_kernel,
            out_shape=jax.ShapeDtypeStruct(x2.shape, dtype),
            grid=grid,
            in_specs=[x_spec, pe_spec],
            out_specs=out_spec,
            compiler_params=pltpu.CompilerParams(**cp_kwargs),
            cost_estimate=cost,
            **extra,
        )(x2, pe2)

    # ---- layout selection ---------------------------------------------------
    use_b = (TE % 128 == 0) and (B >= unit)
    tr = te = None
    if not use_b:
        # Layout A: fold batch into the row axis -> sublane-dense even at B = 1.
        te = _pick_div(E, 128, max(128, target_elems // unit)) if E % 128 == 0 else E
        tr = _pick_div(T, unit, max(unit, target_elems // te))
        if tr is None and B == 1 and T * te * item <= 4 * block_bytes:
            tr = T  # block rows == full rows (B == 1) -> legal whole-row tile
        if tr is None:
            use_b = (TE % 128 == 0)  # sublane-sparse but legal (tb == B == full dim)

    if use_b:
        # ---- Layout B: x -> (B, T*E), pe -> (1, T*E) -------------------------
        tc = _pick_div(TE, 128, max(128, target_elems // unit))   # never None here
        tb = _pick_div(B, unit, max(unit, target_elems // tc))
        if tb is None:
            tb = B  # equals full batch dim -> legal; keep the footprint bounded
            while tb * tc * item > 4 * block_bytes and tc > 128:
                tc = _pick_div(TE, 128, max(128, tc // 2)) or 128
        # v7x: make sure there are >= 2 grid steps so both TensorCores get work.
        if (TE // tc) * (B // tb) == 1:
            half = _pick_div(TE, 128, max(128, tc // 2))
            if half is not None and half < tc:
                tc = half
            else:
                hb = _pick_div(B, unit, max(unit, tb // 2))
                if hb is not None and hb < tb:
                    tb = hb
        # Batch-tile axis innermost -> pe block index constant across consecutive
        # steps, so the pe tile is fetched once per lane tile (no redundant DMA).
        grid = (TE // tc, B // tb)
        out2 = _call(
            embedded_token.reshape(B, TE), pe.reshape(1, TE), grid,
            pl.BlockSpec((tb, tc), lambda j, i: (i, j)),
            pl.BlockSpec((1, tc), lambda j, i: (0, j)),
            pl.BlockSpec((tb, tc), lambda j, i: (i, j)))
        return out2.reshape(B, T, E)

    if tr is not None:
        # ---- Layout A: x -> (B*T, E), pe tiled over token rows ---------------
        R = B * T
        if (E // te) * (R // tr) == 1:  # v7x: split so both TensorCores get work
            half = _pick_div(T, unit, max(unit, tr // 2))
            if half is not None and half < tr:
                tr = half
        nt = T // tr  # pe row-blocks per batch element
        pe_map = (lambda j, i: (0, j)) if nt == 1 else (lambda j, i: (i % nt, j))
        grid = (E // te, R // tr)
        out2 = _call(
            embedded_token.reshape(R, E), pe, grid,
            pl.BlockSpec((tr, te), lambda j, i: (i, j)),
            pl.BlockSpec((tr, te), pe_map),
            pl.BlockSpec((tr, te), lambda j, i: (i, j)))
        return out2.reshape(B, T, E)

    # ---- Layout C: tiny/awkward shapes -> single whole-array block -----------
    # TODO(synk): shapes with both E and T*E non-128-aligned take this unblocked
    # path; fine for small arrays, may exceed VMEM for very large awkward shapes.
    return pl.pallas_call(
        _add_pe_kernel,
        out_shape=jax.ShapeDtypeStruct((B, T, E), dtype),
        cost_estimate=cost,
    )(embedded_token, pe.reshape(1, T, E))


if __name__ == "__main__":
    # Small shapes consistent with the module's forward.
    batch = 2
    num_tokens = 8
    embedding_size = 32
    positional_encoding_scalar = 10000.0

    key = jax.random.PRNGKey(0)
    x = jax.random.normal(key, (batch, num_tokens, embedding_size), dtype=jnp.float32)

    pe = compute_positional_encoding_vector(
        embedding_size, num_tokens, positional_encoding_scalar, dtype=x.dtype)

    out = positional_encoder_forward(x, pe)
    out = jax.block_until_ready(out)

    # Reference check (pure JAX broadcast add).
    ref = x + pe[None, :, :]
    assert out.shape == (batch, num_tokens, embedding_size)
    assert jnp.allclose(out, ref, atol=1e-6, rtol=1e-6)

    print("KERNEL_OK")
</pallas_src>

<mosaic_0001>
module attributes {stable_mosaic.version = 11 : i64} {
  func.func @_add_pe_kernel(%arg0: i32, %arg1: i32, %arg2: memref<8x32xf32, #tpu.memory_space<vmem>>, %arg3: memref<8x32xf32, #tpu.memory_space<vmem>>, %arg4: memref<8x32xf32, #tpu.memory_space<vmem>>) attributes {dimension_semantics = [#tpu.dimension_semantics<parallel>, #tpu.dimension_semantics<parallel>], iteration_bounds = array<i64: 1, 2>, scalar_prefetch = 0 : i64, scratch_operands = 0 : i64, tpu.core_type = #tpu.core_type<tc>, window_params = [{transform_indices = @transform_0, window_bounds = array<i64: 8, 32>}, {transform_indices = @transform_1, window_bounds = array<i64: 8, 32>}, {transform_indices = @transform_2, window_bounds = array<i64: 8, 32>}]} {
    %c0 = arith.constant 0 : index
    %c0_0 = arith.constant 0 : index
    %0 = vector.load %arg2[%c0, %c0_0] : memref<8x32xf32, #tpu.memory_space<vmem>>, vector<8x32xf32>
    %c0_1 = arith.constant 0 : index
    %c0_2 = arith.constant 0 : index
    %1 = vector.load %arg3[%c0_1, %c0_2] : memref<8x32xf32, #tpu.memory_space<vmem>>, vector<8x32xf32>
    %2 = arith.addf %0, %1 : vector<8x32xf32>
    %c0_3 = arith.constant 0 : index
    %c0_4 = arith.constant 0 : index
    %3 = vector.load %arg4[%c0_3, %c0_4] : memref<8x32xf32, #tpu.memory_space<vmem>>, vector<8x32xf32>
    tpu.vector_store %arg4[%c0_3, %c0_4], %2 {strides = array<i32>} : memref<8x32xf32, #tpu.memory_space<vmem>>, vector<8x32xf32>,
    return
  }
  func.func @transform_0(%arg0: i32, %arg1: i32) -> (i32, i32) {
    %c0_i32 = arith.constant 0 : i32
    return %arg1, %arg0 : i32, i32
  }
  func.func @transform_1(%arg0: i32, %arg1: i32) -> (i32, i32) {
    %c0_i32 = arith.constant 0 : i32
    %c0_i32_0 = arith.constant 0 : i32
    return %c0_i32, %arg0 : i32, i32
  }
  func.func @transform_2(%arg0: i32, %arg1: i32) -> (i32, i32) {
    %c0_i32 = arith.constant 0 : i32
    return %arg1, %arg0 : i32, i32
  }
}

</mosaic_0001>

<llo_original>
// kernel: tpu_custom_call.1
$region0: #{tpu_custom_call.1}
  #allocation0 [shape = 'u32[]', space=smem, size = 0x4, offset = 0x4, fixed_abs, tag = 'smem constant byte address 0x4 - core index']
  #allocation1 [shape = 'u32[72,128]{1,0:T(1,128)}', space=vmem, size = 0x9000, scoped, tag = 'internal scratch']
  %s0 = inlined_call_operand.hbm [shape: f32[16,32], index: 0, kind: input, shape index: {}]
  %s1 = inlined_call_operand.hbm [shape: f32[8,32], index: 1, kind: input, shape index: {}]
  %s2 = inlined_call_operand.hbm [shape: f32[16,32], index: 2, kind: output, shape index: {}]
  %s3 = sld [smem:[#allocation0]]
  $region49: #{tpu_custom_call.1} parent=0
    _
  %s5 = ssub.s32 1, %s3
  %s6 = scalar_select 0, %s5, %s3
  $region1: #{tpu_custom_call.1} parent=0
    #allocation2 [shape = 'u8[8192]{0}', space=vmem, size = 0x2000, scoped, tag = 'input window, operand 0']
    #allocation3 [shape = 's32[2]{0}', space=sflag, size = 0x8, scoped, tag = 'scoped memory for tpu_custom_call.1']
    #allocation4 [shape = 's32[2]{0}', space=sflag, size = 0x8, scoped, tag = 'scoped memory for tpu_custom_call.1']
    #allocation5 [shape = 'u8[4096]{0}', space=vmem, size = 0x1000, scoped, tag = 'input window, operand 1, single buffered']
    #allocation6 [shape = 's32[1]{0}', space=sflag, size = 0x4, scoped, tag = 'scoped memory for tpu_custom_call.1']
    #allocation7 [shape = 'u8[8192]{0}', space=vmem, size = 0x2000, scoped, tag = 'output window, operand 0']
    %7 = vsyncpa [#allocation3], 0
    %s8 = scalar_lea.sflag [#allocation3], 1
    %9 = vsyncpa %s8, 0
    %10 = vsyncpa [#allocation6], 0
    %11 = vsyncpa [#allocation4], 0
    %s12 = scalar_lea.sflag [#allocation4], 1
    %13 = vsyncpa %s12, 0
    loop: start=0, step=1, limit=4
    $region2: #{tpu_custom_call.1} parent=1 // loop_pre_header
      _
    $region3: #{tpu_custom_call.1} parent=1 // loop_header
      %s15 = sphi 0, %s19
      %p16 = scmp.ge.s32.totalorder %s15, 4
      %s22 = sphi 0, %s34
      %s23 = sphi 0, %s30
      %s24 = sphi 0, %s22
      %s25 = sphi 0, %s23
      %s26 = sphi 0, %s24
      %s27 = sphi 0, %s25
      %s39 = sphi 0, %s41
      %s42 = sphi 0, %s39
      %s43 = sphi 0, %s42
      %s59 = sphi 0, %s43
      %s65 = sphi 0, %s67
      %s68 = sphi 0, %s65
      %s69 = sphi 0, %s68
      %s85 = sphi 0, %s69
      %s93 = sphi 0, %s95
      %s96 = sphi 0, %s93
      %s97 = sphi 0, %s96
      %s113 = sphi 0, %s97
    $region4: #{tpu_custom_call.1} parent=1 // loop_header_branch
      %18 = sbr.rel (%p16) target = $region8
    $region5: #{tpu_custom_call.1} parent=1 // loop_body
      %s20 = ssub.s32 %s15, 1
      %s21 = ssub.s32 %s15, 2
      %s28 = sadd.s32 1, %s23
      %p29 = scmp.ge.s32.totalorder %s28, 2
      %s30 = scalar_select %p29, 0, %s28
      %s31 = sadd.s32 1, %s22
      %s32 = scalar_select %p29, %s31, %s22
      %p33 = scmp.ge.s32.totalorder %s32, 1
      %s34 = scalar_select %p33, 0, %s32
      %s35 = ssub.s32 %s23, %s30
      %s36 = ssub.s32 %s22, %s34
      %s37 = sor.u32 %s35, %s36
      %p38 = scmp.eq.s32.totalorder %s37, 0
      %s40 = sadd.s32 %s39, 1
      %s41 = scalar_select %p38, %s39, %s40
      %p44 = pneg %p38
      %p45 = scmp.eq.s32.totalorder %s15, 1
      %p46 = por %p44, %p45
      %p47 = scmp.ne.s32.totalorder %s39, %s42
      %p48 = scmp.eq.s32.totalorder %s15, 0
      %p49 = por %p47, %p48
      %p50 = scmp.ne.s32.totalorder %s39, %s42
      %p51 = scmp.eq.s32.totalorder %s20, 1
      %p52 = por %p50, %p51
      %p53 = scmp.ne.s32.totalorder %s42, %s43
      %p54 = scmp.eq.s32.totalorder %s20, 0
      %p55 = por %p53, %p54
      %p56 = scmp.ne.s32.totalorder %s42, %s43
      %p57 = scmp.eq.s32.totalorder %s21, 1
      %p58 = por %p56, %p57
      %p60 = scmp.ne.s32.totalorder %s43, %s59
      %p61 = scmp.eq.s32.totalorder %s21, 0
      %p62 = por %p60, %p61
      %s63 = ssub.s32 %s22, %s34
      %p64 = scmp.eq.s32.totalorder %s63, 0
      %s66 = sadd.s32 %s65, 1
      %s67 = scalar_select %p64, %s65, %s66
      %p70 = pneg %p64
      %p71 = scmp.eq.s32.totalorder %s15, 1
      %p72 = por %p70, %p71
      %p73 = scmp.ne.s32.totalorder %s65, %s68
      %p74 = scmp.eq.s32.totalorder %s15, 0
      %p75 = por %p73, %p74
      %p76 = scmp.ne.s32.totalorder %s65, %s68
      %p77 = scmp.eq.s32.totalorder %s20, 1
      %p78 = por %p76, %p77
      %p79 = scmp.ne.s32.totalorder %s68, %s69
      %p80 = scmp.eq.s32.totalorder %s20, 0
      %p81 = por %p79, %p80
      %p82 = scmp.ne.s32.totalorder %s68, %s69
      %p83 = scmp.eq.s32.totalorder %s21, 1
      %p84 = por %p82, %p83
      %p86 = scmp.ne.s32.totalorder %s69, %s85
      %p87 = scmp.eq.s32.totalorder %s21, 0
      %p88 = por %p86, %p87
      %s89 = ssub.s32 %s23, %s30
      %s90 = ssub.s32 %s22, %s34
      %s91 = sor.u32 %s89, %s90
      %p92 = scmp.eq.s32.totalorder %s91, 0
      %s94 = sadd.s32 %s93, 1
      %s95 = scalar_select %p92, %s93, %s94
      %p98 = pneg %p92
      %p99 = scmp.eq.s32.totalorder %s15, 1
      %p100 = por %p98, %p99
      %p101 = scmp.ne.s32.totalorder %s93, %s96
      %p102 = scmp.eq.s32.totalorder %s15, 0
      %p103 = por %p101, %p102
      %p104 = scmp.ne.s32.totalorder %s93, %s96
      %p105 = scmp.eq.s32.totalorder %s20, 1
      %p106 = por %p104, %p105
      %p107 = scmp.ne.s32.totalorder %s96, %s97
      %p108 = scmp.eq.s32.totalorder %s20, 0
      %p109 = por %p107, %p108
      %p110 = scmp.ne.s32.totalorder %s96, %s97
      %p111 = scmp.eq.s32.totalorder %s21, 1
      %p112 = por %p110, %p111
      %p114 = scmp.ne.s32.totalorder %s97, %s113
      %p115 = scmp.eq.s32.totalorder %s21, 0
      %p116 = por %p114, %p115
      %p117 = scmp.le.s32.totalorder 1, %s15
      %p118 = scmp.lt.s32.totalorder %s15, 3
      %p119 = pnand %p117, %p118
      %p120 = pneg %p119
      // Predicated region
      $region9: #{tpu_custom_call.1} parent=5 // pred_check
        _
      $region10: #{tpu_custom_call.1} parent=5 // pred_check_branch
        %122 = sbr.rel (%p119) target = $region12
      $region11: #{tpu_custom_call.1} parent=5 // pred_region
        %s123 = ssub.s32 %s15, 1
        // Predicated region
        $region13: #{tpu_custom_call.1} parent=11 // pred_check
          %p124 = pneg %p81
        $region14: #{tpu_custom_call.1} parent=11 // pred_check_branch
          %126 = sbr.rel (%p124) target = $region16
        $region15: #{tpu_custom_call.1} parent=11 // pred_region
          %128 = vsyncadd [#allocation6], 0
          %s129 = smul.addr %s24, 8
          %s130 = scalar_lea.hbm %s1, %s129
          %s132 = sshll.u32 %s130, 4
          %s133 = int_to_ptr.hbm [resolvable:$true] %s132
          %s134 = sshll.u32 [#allocation5], 4
          %s135 = int_to_ptr.vmem [resolvable:$true] %s134
          %137 = dma.hbm_to_vmem [thread:$0]  %s133, 128, %s135, [#allocation6]
        $region16: #{tpu_custom_call.1} parent=11 // pred_fallthru
          _
      $region12: #{tpu_custom_call.1} parent=5 // pred_fallthru
        _
      %p138 = scmp.lt.s32.totalorder %s15, 2
      // Predicated region
      $region17: #{tpu_custom_call.1} parent=5 // pred_check
        %p139 = pneg %p138
      $region18: #{tpu_custom_call.1} parent=5 // pred_check_branch
        %141 = sbr.rel (%p139) target = $region20
      $region19: #{tpu_custom_call.1} parent=5 // pred_region
        // Predicated region
        $region21: #{tpu_custom_call.1} parent=19 // pred_check
          %p142 = pneg %p49
        $region22: #{tpu_custom_call.1} parent=19 // pred_check_branch
          %144 = sbr.rel (%p142) target = $region24
        $region23: #{tpu_custom_call.1} parent=19 // pred_region
          %s145 = sand.u32 %s39, 1
          %s146 = scalar_lea.sflag [#allocation3], %s145
          %s147 = sand.u32 %s39, 1
          %s148 = smul.addr %s147, 8
          %s149 = scalar_lea.vmem [#allocation2], %s148
          %151 = vsyncadd %s146, 0
          %s152 = sadd.s32 %s22, %s23
          %s153 = smul.addr %s152, 8
          %s154 = scalar_lea.hbm %s0, %s153
          %s156 = sshll.u32 %s154, 4
          %s157 = int_to_ptr.hbm [resolvable:$true] %s156
          %s158 = sshll.u32 %s149, 4
          %s159 = int_to_ptr.vmem [resolvable:$true] %s158
          %161 = dma.hbm_to_vmem [thread:$0]  %s157, 128, %s159, %s146
        $region24: #{tpu_custom_call.1} parent=19 // pred_fallthru
          _
      $region20: #{tpu_custom_call.1} parent=5 // pred_fallthru
        _
      %p162 = scmp.le.s32.totalorder 1, %s15
      %p163 = scmp.lt.s32.totalorder %s15, 3
      %p164 = pnand %p162, %p163
      %p165 = pneg %p164
      // Predicated region
      $region25: #{tpu_custom_call.1} parent=5 // pred_check
        _
      $region26: #{tpu_custom_call.1} parent=5 // pred_check_branch
        %167 = sbr.rel (%p164) target = $region28
      $region27: #{tpu_custom_call.1} parent=5 // pred_region
        %s168 = ssub.s32 %s15, 1
        %s169 = sand.u32 %s42, 1
        %s170 = scalar_lea.sflag [#allocation3], %s169
        %s171 = sand.u32 %s42, 1
        %s172 = smul.addr %s171, 8
        %s173 = scalar_lea.vmem [#allocation2], %s172
        // Predicated region
        $region29: #{tpu_custom_call.1} parent=27 // pred_check
          %p174 = pneg %p55
        $region30: #{tpu_custom_call.1} parent=27 // pred_check_branch
          %176 = sbr.rel (%p174) target = $region32
        $region31: #{tpu_custom_call.1} parent=27 // pred_region
          %178 = dma.done %s170, 128
        $region32: #{tpu_custom_call.1} parent=27 // pred_fallthru
          _
        // Predicated region
        $region33: #{tpu_custom_call.1} parent=27 // pred_check
          %p179 = pneg %p81
        $region34: #{tpu_custom_call.1} parent=27 // pred_check_branch
          %181 = sbr.rel (%p179) target = $region36
        $region35: #{tpu_custom_call.1} parent=27 // pred_region
          %183 = dma.done [#allocation6], 128
        $region36: #{tpu_custom_call.1} parent=27 // pred_fallthru
          _
        %s184 = sand.u32 %s42, 1
        %s185 = scalar_lea.sflag [#allocation3], %s184
        %s186 = sand.u32 %s42, 1
        %s187 = smul.addr %s186, 8
        %s188 = scalar_lea.vmem [#allocation2], %s187
        %p189 = pneg %p55
        %p190 = pneg %p52
        %p191 = pneg %p81
        %p192 = pneg %p78
        %p193 = pneg %p109
        %p194 = pneg %p106
        %s195 = sand.u32 %s96, 1
        %s196 = scalar_lea.sflag [#allocation4], %s195
        %s197 = sand.u32 %s96, 1
        %s198 = smul.addr %s197, 8
        %s199 = scalar_lea.vmem [#allocation7], %s198
        %v200 = vld [vmem:[%s173] sm:$0xff]
        %v201 = vld [vmem:[#allocation5] sm:$0xff]
        %v202 = vadd.f32 %v200, %v201
        %vm203 = vcmask 261120
        %204 = vst.msk [vmem:[%s199] sm:$0xff] %vm203, %v202
        %s205 = sand.u32 %s96, 1
        %s206 = scalar_lea.sflag [#allocation4], %s205
        %s207 = sand.u32 %s96, 1
        %s208 = smul.addr %s207, 8
        %s209 = scalar_lea.vmem [#allocation7], %s208
        // Predicated region
        $region37: #{tpu_custom_call.1} parent=27 // pred_check
          %p210 = pneg %p106
        $region38: #{tpu_custom_call.1} parent=27 // pred_check_branch
          %212 = sbr.rel (%p210) target = $region40
        $region39: #{tpu_custom_call.1} parent=27 // pred_region
          %214 = vsyncadd %s206, 0
          %s215 = sadd.s32 %s24, %s25
          %s216 = smul.addr %s215, 8
          %s217 = scalar_lea.hbm %s2, %s216
          %s219 = sshll.u32 %s209, 4
          %s220 = int_to_ptr.vmem [resolvable:$true] %s219
          %s221 = sshll.u32 %s217, 4
          %s222 = int_to_ptr.hbm [resolvable:$true] %s221
          %224 = dma.vmem_to_hbm [thread:$0]  %s220, 128, %s222, %s206
        $region40: #{tpu_custom_call.1} parent=27 // pred_fallthru
          _
      $region28: #{tpu_custom_call.1} parent=5 // pred_fallthru
        _
      %p225 = scmp.le.s32.totalorder 2, %s15
      // Predicated region
      $region41: #{tpu_custom_call.1} parent=5 // pred_check
        %p226 = pneg %p225
      $region42: #{tpu_custom_call.1} parent=5 // pred_check_branch
        %228 = sbr.rel (%p226) target = $region44
      $region43: #{tpu_custom_call.1} parent=5 // pred_region
        %s229 = ssub.s32 %s15, 2
        // Predicated region
        $region45: #{tpu_custom_call.1} parent=43 // pred_check
          %p230 = pneg %p112
        $region46: #{tpu_custom_call.1} parent=43 // pred_check_branch
          %232 = sbr.rel (%p230) target = $region48
        $region47: #{tpu_custom_call.1} parent=43 // pred_region
          %s233 = sand.u32 %s97, 1
          %s234 = scalar_lea.sflag [#allocation4], %s233
          %s235 = sand.u32 %s97, 1
          %s236 = smul.addr %s235, 8
          %s237 = scalar_lea.vmem [#allocation7], %s236
          %239 = dma.done %s234, 128
        $region48: #{tpu_custom_call.1} parent=43 // pred_fallthru
          _
      $region44: #{tpu_custom_call.1} parent=5 // pred_fallthru
        _
    $region6: #{tpu_custom_call.1} parent=1 // loop_footer
      %s19 = sadd.s32 1, %s15
    $region7: #{tpu_custom_call.1} parent=1 // loop_footer_branch
      %14 = sbr.rel target = $region3
    $region8: #{tpu_custom_call.1} parent=1 // loop_exit
      _
    %240 = vsyncpa [#allocation3], 1
    %s241 = scalar_lea.sflag [#allocation3], 1
    %242 = vsyncpa %s241, 1
    %243 = vsyncpa [#allocation6], 1
    %244 = vsyncpa [#allocation4], 1
    %s245 = scalar_lea.sflag [#allocation4], 1
    %246 = vsyncpa %s245, 1

</llo_original>
